<compile_context>
chip_gen: v7x
topology: tpu7x:2x2x1
jax: 0.10.0
libtpu: 0.0.40
codegen_flags: <defaults>
</compile_context>

<pallas_src>
import math
import functools

import jax
import jax.numpy as jnp
from jax.experimental import pallas as pl
from jax.experimental.pallas import tpu as pltpu


def _pe_dropout_kernel(*refs, block_rows, train, keep_threshold, keep_scale):
    # refs: x, inv_freq, phase, [bits], out   -- all 2-D [rows, B*D] blocks
    if train:
        x_ref, freq_ref, phase_ref, bits_ref, o_ref = refs
    else:
        x_ref, freq_ref, phase_ref, o_ref = refs

    x = x_ref[...]                                   # (block_rows, B*D)
    shape = x.shape

    # Sequence position of every row in this tile (sublane axis).
    row0 = pl.program_id(0) * block_rows
    pos = (row0 + jax.lax.broadcasted_iota(jnp.int32, shape, 0)).astype(jnp.float32)

    # pe[pos, d] = sin(pos * inv_freq[d] + phase[d]); phase[d] = pi/2 for odd d
    # (sin(a + pi/2) == cos(a)), so a single transcendental covers sin & cos slots.
    angle = pos * freq_ref[...] + phase_ref[...]     # (1, B*D) constants broadcast
    y = x + jnp.sin(angle).astype(x.dtype)

    if train:
        # Inverted dropout: bits is uniform int32, keep iff bits >= threshold
        # where threshold = round(p * 2^32) - 2^31  =>  P(keep) = 1 - p.
        keep = bits_ref[...] >= jnp.int32(keep_threshold)
        y = jnp.where(keep, y * jnp.asarray(keep_scale, y.dtype), jnp.zeros_like(y))

    o_ref[...] = y


def _pick_block_rows(n_rows, row_bytes, target_bytes=1 << 20):
    """Largest multiple-of-8 divisor of n_rows giving ~target_bytes blocks while
    keeping >= 8 grid steps when possible (so DMA pipelining can overlap)."""
    if n_rows <= 8:
        return n_rows
    cap = max(8, target_bytes // max(row_bytes, 1))
    cap = min(cap, max(8, n_rows // 8))
    best = None
    d = 8
    limit = min(n_rows, cap)
    while d <= limit:
        if n_rows % d == 0:
            best = d
        d += 8
    return best if best is not None else n_rows     # fallback: single full block


def positional_encoding_forward(x, *, dropout_p=0.1, train=False, rng=None,
                                max_len=5000, block_rows=None):
    """x: [S, B, D].  Returns x + pe[:S] (plus inverted dropout when train=True)."""
    S, B, D = x.shape
    assert S <= max_len, "sequence length exceeds max_len"
    assert D % 2 == 0, "d_model must be even (matches the PyTorch buffer layout)"
    assert 0.0 <= dropout_p < 1.0

    C = B * D
    x2 = x.reshape(S, C)                             # lane-dense fused (batch, embed) axis

    # Per-lane sinusoid constants, tiled over the B batch slots of the fused axis.
    d = jnp.arange(D)
    inv_freq_d = jnp.exp(((d // 2) * 2).astype(jnp.float32) * (-math.log(10000.0) / D))
    phase_d = jnp.where((d % 2) == 1, jnp.float32(math.pi / 2.0), jnp.float32(0.0))
    inv_freq = jnp.tile(inv_freq_d, B).reshape(1, C)
    phase = jnp.tile(phase_d, B).reshape(1, C)

    if block_rows is None:
        block_rows = _pick_block_rows(S, C * x.dtype.itemsize)
    assert S % block_rows == 0

    do_dropout = bool(train) and dropout_p > 0.0
    keep_threshold = int(round(dropout_p * (1 << 32))) - (1 << 31)
    keep_scale = 1.0 / (1.0 - dropout_p)

    row_spec = pl.BlockSpec((block_rows, C), lambda i: (i, 0))
    lane_spec = pl.BlockSpec((1, C), lambda i: (0, 0))   # resident constants

    in_specs = [row_spec, lane_spec, lane_spec]
    inputs = [x2, inv_freq, phase]
    if do_dropout:
        if rng is None:
            rng = jax.random.PRNGKey(0)
        bits = jax.lax.bitcast_convert_type(
            jax.random.bits(rng, (S, C), dtype=jnp.uint32), jnp.int32)
        in_specs.append(row_spec)
        inputs.append(bits)

    kernel = functools.partial(
        _pe_dropout_kernel,
        block_rows=block_rows, train=do_dropout,
        keep_threshold=keep_threshold, keep_scale=keep_scale)

    out2 = pl.pallas_call(
        kernel,
        out_shape=jax.ShapeDtypeStruct((S, C), x.dtype),
        grid=(S // block_rows,),
        in_specs=in_specs,
        out_specs=row_spec,
        compiler_params=pltpu.CompilerParams(
            dimension_semantics=("parallel",)),       # v7x megacore can split S-tiles
    )(*inputs)

    return out2.reshape(S, B, D)


def _reference_pe_add(x, max_len=5000):
    """Pure-JAX replica of the PyTorch buffer construction + add (eval mode)."""
    S, B, D = x.shape
    position = jnp.arange(0, max_len, dtype=jnp.float32)[:, None]           # [L,1]
    div_term = jnp.exp(jnp.arange(0, D, 2, dtype=jnp.float32)
                       * (-math.log(10000.0) / D))                           # [D/2]
    pe = jnp.zeros((max_len, D), dtype=jnp.float32)
    pe = pe.at[:, 0::2].set(jnp.sin(position * div_term))
    pe = pe.at[:, 1::2].set(jnp.cos(position * div_term))
    return x + pe[:S][:, None, :]


if __name__ == "__main__":
    key = jax.random.PRNGKey(0)
    S, B, D = 8, 2, 32
    x = jax.random.normal(key, (S, B, D), dtype=jnp.float32)

    # Eval mode (dropout is identity) -- must match the PyTorch module in eval().
    out_eval = positional_encoding_forward(x, dropout_p=0.1, train=False)
    out_eval = jax.block_until_ready(out_eval)
    ref = _reference_pe_add(x)
    assert out_eval.shape == (S, B, D)
    assert jnp.allclose(out_eval, ref, atol=1e-5, rtol=1e-5), \
        float(jnp.max(jnp.abs(out_eval - ref)))

    # Training mode: inverted dropout with host-supplied random bits.
    p = 0.1
    out_train = positional_encoding_forward(
        x, dropout_p=p, train=True, rng=jax.random.PRNGKey(123))
    out_train = jax.block_until_ready(out_train)
    assert out_train.shape == (S, B, D)
    # Kept entries must equal ref / (1 - p); dropped entries are exactly zero.
    scale = 1.0 / (1.0 - p)
    ref_scaled = ref * scale
    check = jnp.where(out_train == 0, ref_scaled, out_train)
    assert jnp.allclose(check, ref_scaled, atol=1e-4, rtol=1e-4)

    print("KERNEL_OK")
</pallas_src>

<mosaic_0001>
module attributes {stable_mosaic.version = 11 : i64} {
  func.func @_pe_dropout_kernel(%arg0: i32, %arg1: memref<8x64xf32, #tpu.memory_space<vmem>>, %arg2: memref<1x64xf32, #tpu.memory_space<vmem>>, %arg3: memref<1x64xf32, #tpu.memory_space<vmem>>, %arg4: memref<8x64xf32, #tpu.memory_space<vmem>>) attributes {dimension_semantics = [#tpu.dimension_semantics<parallel>], iteration_bounds = array<i64: 1>, scalar_prefetch = 0 : i64, scratch_operands = 0 : i64, tpu.core_type = #tpu.core_type<tc>, window_params = [{transform_indices = @transform_0, window_bounds = array<i64: 8, 64>}, {pipeline_mode = #tpu.pipeline_mode<synchronous>, transform_indices = @transform_1, window_bounds = array<i64: 1, 64>}, {pipeline_mode = #tpu.pipeline_mode<synchronous>, transform_indices = @transform_2, window_bounds = array<i64: 1, 64>}, {transform_indices = @transform_3, window_bounds = array<i64: 8, 64>}]} {
    %c0 = arith.constant 0 : index
    %c0_0 = arith.constant 0 : index
    %0 = vector.load %arg1[%c0, %c0_0] : memref<8x64xf32, #tpu.memory_space<vmem>>, vector<8x64xf32>
    %c8_i32 = arith.constant 8 : i32
    %1 = arith.muli %arg0, %c8_i32 : i32
    %2 = tpu.iota {dimensions = array<i32: 0>} : vector<8x64xi32>
    %3 = vector.broadcast %1 : i32 to vector<8x64xi32>
    %4 = arith.addi %3, %2 : vector<8x64xi32>
    %5 = arith.sitofp %4 : vector<8x64xi32> to vector<8x64xf32>
    %c0_1 = arith.constant 0 : index
    %c0_2 = arith.constant 0 : index
    %6 = vector.load %arg2[%c0_1, %c0_2] : memref<1x64xf32, #tpu.memory_space<vmem>>, vector<1x64xf32>
    %7 = vector.broadcast %6 : vector<1x64xf32> to vector<8x64xf32>
    %8 = arith.mulf %5, %7 : vector<8x64xf32>
    %c0_3 = arith.constant 0 : index
    %c0_4 = arith.constant 0 : index
    %9 = vector.load %arg3[%c0_3, %c0_4] : memref<1x64xf32, #tpu.memory_space<vmem>>, vector<1x64xf32>
    %10 = vector.broadcast %9 : vector<1x64xf32> to vector<8x64xf32>
    %11 = arith.addf %8, %10 : vector<8x64xf32>
    %12 = math.sin %11 : vector<8x64xf32>
    %13 = arith.addf %0, %12 : vector<8x64xf32>
    %c0_5 = arith.constant 0 : index
    %c0_6 = arith.constant 0 : index
    %14 = vector.load %arg4[%c0_5, %c0_6] : memref<8x64xf32, #tpu.memory_space<vmem>>, vector<8x64xf32>
    tpu.vector_store %arg4[%c0_5, %c0_6], %13 {strides = array<i32>} : memref<8x64xf32, #tpu.memory_space<vmem>>, vector<8x64xf32>,
    return
  }
  func.func @transform_0(%arg0: i32) -> (i32, i32) {
    %c0_i32 = arith.constant 0 : i32
    %c0_i32_0 = arith.constant 0 : i32
    return %arg0, %c0_i32 : i32, i32
  }
  func.func @transform_1(%arg0: i32) -> (i32, i32) {
    %c0_i32 = arith.constant 0 : i32
    %c0_i32_0 = arith.constant 0 : i32
    %c0_i32_1 = arith.constant 0 : i32
    return %c0_i32, %c0_i32_0 : i32, i32
  }
  func.func @transform_2(%arg0: i32) -> (i32, i32) {
    %c0_i32 = arith.constant 0 : i32
    %c0_i32_0 = arith.constant 0 : i32
    %c0_i32_1 = arith.constant 0 : i32
    return %c0_i32, %c0_i32_0 : i32, i32
  }
  func.func @transform_3(%arg0: i32) -> (i32, i32) {
    %c0_i32 = arith.constant 0 : i32
    %c0_i32_0 = arith.constant 0 : i32
    return %arg0, %c0_i32 : i32, i32
  }
}

</mosaic_0001>

<llo_original>
// kernel: tpu_custom_call.1
$region0: #{tpu_custom_call.1}
  #allocation0 [shape = 'u32[]', space=smem, size = 0x4, offset = 0x4, fixed_abs, tag = 'smem constant byte address 0x4 - core index']
  #allocation1 [shape = 'u32[144,128]{1,0:T(1,128)}', space=vmem, size = 0x12000, scoped, tag = 'internal scratch']
  %s0 = inlined_call_operand.hbm [shape: f32[8,64], index: 0, kind: input, shape index: {}]
  %s1 = inlined_call_operand.vmem [shape: f32[1,64], index: 1, kind: input, shape index: {}]
  %s2 = inlined_call_operand.vmem [shape: f32[1,64], index: 2, kind: input, shape index: {}]
  %s3 = inlined_call_operand.hbm [shape: f32[8,64], index: 3, kind: output, shape index: {}]
  %s4 = sld [smem:[#allocation0]]
  $region26: #{tpu_custom_call.1} parent=0
    _
  %s6 = ssub.s32 1, %s4
  %s7 = scalar_select 0, %s6, %s4
  $region1: #{tpu_custom_call.1} parent=0
    #allocation2 [shape = 'u8[4096]{0}', space=vmem, size = 0x1000, scoped, tag = 'input window, operand 0, single buffered']
    #allocation3 [shape = 's32[1]{0}', space=sflag, size = 0x4, scoped, tag = 'scoped memory for tpu_custom_call.1']
    #allocation4 [shape = 's32[1]{0}', space=sflag, size = 0x4, scoped, tag = 'scoped memory for tpu_custom_call.1']
    #allocation5 [shape = 'u8[4096]{0}', space=vmem, size = 0x1000, scoped, tag = 'output window, operand 0, single buffered']
    %8 = vsyncpa [#allocation3], 0
    %9 = vsyncpa [#allocation4], 0
    // Predicated region
    $region2: #{tpu_custom_call.1} parent=1 // pred_check
      _
    $region3: #{tpu_custom_call.1} parent=1 // pred_check_branch
      %11 = sbr.rel (0) target = $region5
    $region4: #{tpu_custom_call.1} parent=1 // pred_region
      %s13 = ssub.s32 128, 128
      %14 = vsyncadd [#allocation3], %s13
      %s16 = sshll.u32 [#allocation2], 4
      %s17 = int_to_ptr.vmem [resolvable:$true] %s16
      %19 = dma.hbm_to_vmem [thread:$0]  %s0, 128, %s17, [#allocation3]
    $region5: #{tpu_custom_call.1} parent=1 // pred_fallthru
      _
    // Predicated region
    $region6: #{tpu_custom_call.1} parent=1 // pred_check
      _
    $region7: #{tpu_custom_call.1} parent=1 // pred_check_branch
      %21 = sbr.rel (0) target = $region9
    $region8: #{tpu_custom_call.1} parent=1 // pred_region
      _
    $region9: #{tpu_custom_call.1} parent=1 // pred_fallthru
      _
    // Predicated region
    $region10: #{tpu_custom_call.1} parent=1 // pred_check
      _
    $region11: #{tpu_custom_call.1} parent=1 // pred_check_branch
      %23 = sbr.rel (0) target = $region13
    $region12: #{tpu_custom_call.1} parent=1 // pred_region
      _
    $region13: #{tpu_custom_call.1} parent=1 // pred_fallthru
      _
    // Predicated region
    $region14: #{tpu_custom_call.1} parent=1 // pred_check
      _
    $region15: #{tpu_custom_call.1} parent=1 // pred_check_branch
      %25 = sbr.rel (0) target = $region17
    $region16: #{tpu_custom_call.1} parent=1 // pred_region
      %26 = dma.done [#allocation3], 128
    $region17: #{tpu_custom_call.1} parent=1 // pred_fallthru
      _
    %v27 = vld [vmem:[#allocation2] sm:$0xff]
    %s28 = smul.u32 0, 8
    %v29 = vlaneseq
    %v30 = vshrl.u32 %v29, 7
    %v31 = vstv %s28
    %v32 = vadd.s32 %v31, %v30
    %v33 = vcvt.s32.f32 %v32
    %v34 = vld [vmem:[%s1] sm:$0x1]
    %v36 = vlaneseq
    %v37 = vshrl.u32 %v36, 7
    %v38 = vsub.s32 0, %v37
    %v39 = vrot.slane %v34, %v38
    %v41 = vmul.f32 %v33, %v39
    %v42 = vld [vmem:[%s2] sm:$0x1]
    %v44 = vlaneseq
    %v45 = vshrl.u32 %v44, 7
    %v46 = vsub.s32 0, %v45
    %v47 = vrot.slane %v42, %v46
    %v49 = vadd.f32 %v41, %v47
    %v50 = vand.u32 2147483647, %v49
    %vm51 = vcmp.le.f32.partialorder %v50, 0.7853982
    %vm52 = vcmp.lt.s32.totalorder %v49, 0
    %v53 = vand.u32 %v49, 2139095040
    %v54 = vshrl.u32 %v53, 23
    %v55 = vsub.s32 %v54, 127
    %v56 = vand.u32 2147483647, %v49
    %v57 = vand.u32 %v56, 8388607
    %v58 = vor.u32 %v57, 8388608
    %v59 = vsub.s32 0, %v58
    %v60 = vadd.s32 %v55, 1
    %vm61 = vcmp.gt.s32.totalorder %v60, 0
    %v62 = vsel %vm61, %v60, 0
    %v63 = vshrl.u32 %v62, 5
    %v64 = vand.u32 %v62, 31
    %v65 = vsub.s32 32, %v64
    %v66 = vshrl.u32 683565275, %v65
    %v67 = vshll.u32 683565275, %v64
    %v68 = vshrl.u32 2475754826, %v65
    %v69 = vor.u32 %v67, %v68
    %v70 = vshll.u32 2475754826, %v64
    %v71 = vshrl.u32 2131351028, %v65
    %v72 = vor.u32 %v70, %v71
    %v73 = vshll.u32 2131351028, %v64
    %v74 = vshrl.u32 2102212464, %v65
    %v75 = vor.u32 %v73, %v74
    %v76 = vshll.u32 2102212464, %v64
    %v77 = vshrl.u32 920167782, %v65
    %v78 = vor.u32 %v76, %v77
    %v79 = vshll.u32 920167782, %v64
    %v80 = vshrl.u32 1326507024, %v65
    %v81 = vor.u32 %v79, %v80
    %vm82 = vcmp.lt.s32.totalorder %v63, 1
    %vm83 = vcmp.lt.s32.totalorder %v63, 2
    %vm84 = vcmp.lt.s32.totalorder %v63, 3
    %vm85 = vcmp.lt.s32.totalorder %v63, 4
    %v86 = vsel %vm82, %v66, %v69
    %v87 = vsel %vm85, %v75, 2102212464
    %v88 = vsel %vm84, %v72, %v87
    %v89 = vsel %vm83, %v86, %v88
    %v90 = vsel %vm82, %v69, %v72
    %v91 = vsel %vm85, %v78, 920167782
    %v92 = vsel %vm84, %v75, %v91
    %v93 = vsel %vm83, %v90, %v92
    %v94 = vsel %vm82, %v72, %v75
    %v95 = vsel %vm85, %v81, 1326507024
    %v96 = vsel %vm84, %v78, %v95
    %v97 = vsel %vm83, %v94, %v96
    %v98 = vshll.u32 %v58, 8
    %v99 = vmul.u32.u64.compose %v98, %v97
    %v100 = vextract.low.u32 %v99
    %v101 = vextract.high.u32 %v99
    %v102 = vmul.u32.u64.compose %v98, %v93
    %v103 = vextract.low.u32 %v102
    %v104 = vextract.high.u32 %v102
    %v105 = vmul.u32 %v98, %v89
    %v106 = vadd.s32 %v101, %v103
    %vm107 = vc.u32 %v101, %v103
    %v108 = vadd.s32 %v104, 1
    %v109 = vsel %vm107, %v108, %v104
    %v110 = vadd.s32 %v105, %v109
    %v111 = vadd.s32 %v110, 536870912
    %v112 = vshrl.u32 %v111, 30
    %v113 = vshll.u32 %v112, 30
    %v114 = vsub.s32 %v110, %v113
    %vm115 = vcmp.lt.s32.totalorder %v114, 0
    %v116 = vsub.s32 0, %v114
    %v117 = vsel %vm115, %v116, %v114
    %v118 = vclz %v117
    %v119 = vsub.s32 %v118, 2
    %vm120 = vcmp.gt.s32.totalorder 0, %v119
    %v121 = vsel %vm120, 0, %v119
    %v122 = vsub.s32 32, %v121
    %v123 = vshll.u32 %v114, %v121
    %v124 = vshrl.u32 %v106, %v122
    %v125 = vor.u32 %v123, %v124
    %v126 = vsub.s32 4294967266, %v121
    %v127 = vadd.s32 %v126, 127
    %v128 = vshll.u32 %v127, 23
    %v129 = vor.u32 4788187, %v128
    %v130 = vand.u32 2147483647, %v129
    %v132 = vcvt.s32.f32 %v125
    %v133 = vmul.f32 %v132, %v130
    %v134 = vxor.u32 %v133, 2147483648
    %v135 = vsel %vm52, %v134, %v133
    %v136 = vsub.s32 4, %v112
    %v137 = vsel %vm52, %v136, %v112
    %v138 = vsel %vm51, %v49, %v135
    %v139 = vsel %vm51, 0, %v137
    %v140 = vcosq.f32.pop %v138
    %v141 = vsinq.f32.pop %v138
    %vm142 = vweird.f32 %v49
    %v143 = vadd.s32 %v139, 3
    %v144 = vand.u32 %v143, 3
    %vm145 = vcmp.lt.s32.totalorder %v144, 2
    %vm146 = vcmp.eq.s32.totalorder %v144, 0
    %v147 = vxor.u32 %v141, 2147483648
    %v148 = vsel %vm146, %v140, %v147
    %vm149 = vcmp.eq.s32.totalorder %v144, 2
    %v150 = vxor.u32 %v140, 2147483648
    %v151 = vsel %vm149, %v150, %v141
    %v152 = vsel %vm145, %v148, %v151
    %v153 = vsel %vm142, nan, %v152
    %v154 = vadd.f32 %v27, %v153
    %vm155 = vcmask 523264
    %156 = vst.msk [vmem:[#allocation5] sm:$0xff] %vm155, %v154
    // Predicated region
    $region18: #{tpu_custom_call.1} parent=1 // pred_check
      _
    $region19: #{tpu_custom_call.1} parent=1 // pred_check_branch
      %158 = sbr.rel (0) target = $region21
    $region20: #{tpu_custom_call.1} parent=1 // pred_region
      %s160 = ssub.s32 128, 128
      %161 = vsyncadd [#allocation4], %s160
      %s163 = sshll.u32 [#allocation5], 4
      %s164 = int_to_ptr.vmem [resolvable:$true] %s163
      %166 = dma.vmem_to_hbm [thread:$0]  %s164, 128, %s3, [#allocation4]
    $region21: #{tpu_custom_call.1} parent=1 // pred_fallthru
      _
    // Predicated region
    $region22: #{tpu_custom_call.1} parent=1 // pred_check
      _
    $region23: #{tpu_custom_call.1} parent=1 // pred_check_branch
      %168 = sbr.rel (0) target = $region25
    $region24: #{tpu_custom_call.1} parent=1 // pred_region
      %169 = dma.done [#allocation4], 128
    $region25: #{tpu_custom_call.1} parent=1 // pred_fallthru
      _
    %170 = vsyncpa [#allocation3], 1
    %171 = vsyncpa [#allocation4], 1

</llo_original>
